<compile_context>
chip_gen: v7x
topology: tpu7x:2x2x1
jax: 0.10.0
libtpu: 0.0.40
codegen_flags: <defaults>
</compile_context>

<pallas_src>
from functools import partial

import numpy as np
import jax
import jax.numpy as jnp
from jax import lax
from jax.experimental import pallas as pl
from jax.experimental.pallas import tpu as pltpu


_NEG_INF = -jnp.finfo(jnp.float32).max
_LOG2_E = 1.4426950408889634      # exp(x) == exp2(x * log2(e))
_STATS_LANES = 128                # lane-replicated m / l scratch width

_DEF_BLOCK_Q_CAP = 1024           # KV re-streaming scales with N / block_q
_DEF_BLOCK_K_CAP = 512


def _round_up(x, m):
    return ((x + m - 1) // m) * m


def _pick_block(n, cap):
    """Block size (multiple of 8, <= cap) that minimizes padding of n."""
    n8 = _round_up(max(int(n), 1), 8)
    if n8 <= cap:
        return n8
    best_t, best_pad = cap, _round_up(n8, cap) - n8
    t = cap // 2
    while t >= 128:
        pad = _round_up(n8, t) - n8
        if pad < best_pad:
            best_t, best_pad = t, pad
        t //= 2
    return best_t


# ----------------------------- kernel helpers ------------------------------


def _init_scratch(q_ref, qs_sc, m_sc, l_sc, acc_sc, scale_log2e):
    # Hoisted once per q tile: fold softmax scale * log2(e) into q so every
    # kv step uses exp2 (removes nk-1 redundant q*scale VPU passes and the
    # hidden x*log2e multiply inside exp).
    qs_sc[...] = (q_ref[0, 0] * scale_log2e).astype(qs_sc.dtype)
    m_sc[...] = jnp.full(m_sc.shape, -jnp.inf, dtype=m_sc.dtype)
    l_sc[...] = jnp.zeros(l_sc.shape, dtype=l_sc.dtype)
    acc_sc[...] = jnp.zeros(acc_sc.shape, dtype=acc_sc.dtype)


def _softmax_step(qs_sc, k_ref, v_ref, m_sc, l_sc, acc_sc, mask_fn):
    # One kv tile of the online softmax (base-2 logits).
    q = qs_sc[...]                           # (tq, D), pre-scaled, input dtype
    k = k_ref[0, 0]                          # (tk, D)
    v = v_ref[0, 0]                          # (tk, D)
    # s[i, j] = sum_d q[i, d] * k[j, d]: contract last dims, no explicit k.T.
    s = lax.dot_general(q, k, (((1,), (1,)), ((), ())),
                        preferred_element_type=jnp.float32)   # (tq, tk) f32
    if mask_fn is not None:
        s = mask_fn(s)
    m_prev = m_sc[...]                                         # (tq, 128)
    m_new = jnp.maximum(m_prev, jnp.max(s, axis=-1, keepdims=True))
    alpha = jnp.exp2(m_prev - m_new)                           # (tq, 128)
    p = jnp.exp2(s - m_new[:, 0:1])                            # (tq, tk) f32
    l_sc[...] = alpha * l_sc[...] + jnp.sum(p, axis=-1, keepdims=True)
    acc_sc[...] = alpha[:, 0:1] * acc_sc[...] + jnp.dot(
        p.astype(v.dtype), v, preferred_element_type=jnp.float32)
    m_sc[...] = m_new


def _finalize(o_ref, l_sc, acc_sc):
    # EUP approximate reciprocal (~1e-3 rel error): fine for the forward pass.
    inv_l = pl.reciprocal(l_sc[...], approx=True)              # (tq, 128)
    o_ref[0, 0] = (acc_sc[...] * inv_l[:, 0:1]).astype(o_ref.dtype)


def _mask_fn(qi, ki, block_q, block_k, *, causal, offset, kv_valid, pad_kv):
    def fn(s):
        col = ki * block_k + lax.broadcasted_iota(jnp.int32, s.shape, 1)
        cond = None
        if causal:
            row = qi * block_q + lax.broadcasted_iota(jnp.int32, s.shape, 0)
            cond = col > row + offset           # torch: triu(j - i + 1)
        if pad_kv:
            pad = col >= kv_valid               # padded (non-existent) keys
            cond = pad if cond is None else jnp.logical_or(cond, pad)
        return jnp.where(cond, _NEG_INF, s) if cond is not None else s
    return fn


# ------------------------------ kernel bodies ------------------------------


def _attend_kernel_causal(qi_ref, ki_ref, q_ref, k_ref, v_ref, o_ref,
                          qs_sc, m_sc, l_sc, acc_sc, *,
                          scale_log2e, block_q, block_k, offset,
                          kv_valid, pad_kv, nk):
    s_idx = pl.program_id(2)
    qi = qi_ref[s_idx]
    ki = ki_ref[s_idx]

    @pl.when(ki == 0)                      # first scheduled step of this q tile
    def _():
        _init_scratch(q_ref, qs_sc, m_sc, l_sc, acc_sc, scale_log2e)

    q_lo = qi * block_q
    q_hi = q_lo + (block_q - 1)
    k_hi = ki * block_k + (block_k - 1)

    # Fully-above-diagonal tiles never appear in the flattened schedule, so a
    # step is either fully visible or needs the causal / kv-padding mask.
    no_mask = k_hi <= q_lo + offset
    if pad_kv:
        no_mask = jnp.logical_and(no_mask, k_hi < kv_valid)
    masked = _mask_fn(qi, ki, block_q, block_k, causal=True, offset=offset,
                      kv_valid=kv_valid, pad_kv=pad_kv)
    pl.when(no_mask)(
        lambda: _softmax_step(qs_sc, k_ref, v_ref, m_sc, l_sc, acc_sc, None))
    pl.when(jnp.logical_not(no_mask))(
        lambda: _softmax_step(qs_sc, k_ref, v_ref, m_sc, l_sc, acc_sc, masked))

    # Same formula as the host-side schedule -> fires on this q tile's last step.
    last_ki = jnp.clip((q_hi + offset) // block_k, 0, nk - 1)

    @pl.when(ki == last_ki)
    def _():
        _finalize(o_ref, l_sc, acc_sc)
    # TODO(synk): causal with J < N — q rows whose keys are all masked end up
    # as a uniform average over the visited kv tile (finite sentinel), which
    # differs from torch only in that degenerate configuration.


def _attend_kernel_dense(q_ref, k_ref, v_ref, o_ref,
                         qs_sc, m_sc, l_sc, acc_sc, *,
                         scale_log2e, block_k, kv_valid, pad_kv):
    ki = pl.program_id(3)
    nk = pl.num_programs(3)

    @pl.when(ki == 0)
    def _():
        _init_scratch(q_ref, qs_sc, m_sc, l_sc, acc_sc, scale_log2e)

    if pad_kv:
        k_hi = ki * block_k + (block_k - 1)
        has_pad = k_hi >= kv_valid
        masked = _mask_fn(0, ki, 0, block_k, causal=False, offset=0,
                          kv_valid=kv_valid, pad_kv=True)
        pl.when(jnp.logical_not(has_pad))(
            lambda: _softmax_step(qs_sc, k_ref, v_ref, m_sc, l_sc, acc_sc, None))
        pl.when(has_pad)(
            lambda: _softmax_step(qs_sc, k_ref, v_ref, m_sc, l_sc, acc_sc, masked))
    else:
        _softmax_step(qs_sc, k_ref, v_ref, m_sc, l_sc, acc_sc, None)

    @pl.when(ki == nk - 1)
    def _():
        _finalize(o_ref, l_sc, acc_sc)


# --------------------------------- wrapper ---------------------------------


def attend(q, k, v, *, causal=False, scale=None, block_q=None, block_k=None):
    """Pallas equivalent of Attend.forward(q, k, v) for the default config.

    q: [B, H, N, D], k/v: [B, H, J, D] (kv_heads == heads). Returns [B, H, N, D].
    Matmuls run in the input dtype (pass bf16 q/k/v for the fast MXU path;
    softmax stats / accumulation are always f32).
    # TODO(synk): mask / attn_bias / prev_attn / talking-heads / sparse-topk /
    #             sigmoid / hard / selective / l2-distance / add_zero_kv / cope
    #             branches and the Intermediates return are not wired in
    #             (default-config forward path only).
    # TODO(synk): for D < 128 the output store is lane-masked; packing two
    #             heads per lane-dense output slab is a further optimization.
    """
    B, H, N, D = q.shape
    J = k.shape[-2]
    assert k.shape == (B, H, J, D) and v.shape == (B, H, J, D), \
        "kv_heads must equal heads for this kernel"   # TODO(synk): GQA repeat

    scale = float(scale if scale is not None else D ** (-0.5))
    if N == 1:                        # n == 1 and causal -> causal disabled
        causal = False
    causal = bool(causal)

    tq = int(block_q) if block_q is not None else _pick_block(N, _DEF_BLOCK_Q_CAP)
    tk = int(block_k) if block_k is not None else _pick_block(J, _DEF_BLOCK_K_CAP)
    assert tq % 8 == 0 and tk % 8 == 0, "block sizes must be multiples of 8"

    n_pad = _round_up(N, tq)
    j_pad = _round_up(J, tk)
    if n_pad != N:
        q = jnp.pad(q, ((0, 0), (0, 0), (0, n_pad - N), (0, 0)))
    if j_pad != J:
        k = jnp.pad(k, ((0, 0), (0, 0), (0, j_pad - J), (0, 0)))
        v = jnp.pad(v, ((0, 0), (0, 0), (0, j_pad - J), (0, 0)))
    pad_kv = j_pad != J

    nq, nk = n_pad // tq, j_pad // tk
    offset = J - N                    # torch causal offset (original lengths)
    scale_log2e = scale * _LOG2_E

    # Rough per-step VMEM footprint -> scoped-VMEM request (double-buffered
    # q/out/k/v tiles + persistent scratch + f32 S/P temporaries); stay well
    # under the 64 MiB v7x physical VMEM.
    in_bytes = q.dtype.itemsize
    est = (2 * (2 * tq * D + 2 * tk * D) * in_bytes
           + tq * D * in_bytes
           + 2 * tq * _STATS_LANES * 4 + tq * D * 4
           + 3 * tq * tk * 4)
    vmem_limit = int(min(max(2 * est, 32 * 1024 * 1024), 48 * 1024 * 1024))

    scratch_shapes = [
        pltpu.VMEM((tq, D), q.dtype),                  # scaled q (hoisted)
        pltpu.VMEM((tq, _STATS_LANES), jnp.float32),   # running max m (lane-replicated)
        pltpu.VMEM((tq, _STATS_LANES), jnp.float32),   # running sum l (lane-replicated)
        pltpu.VMEM((tq, D), jnp.float32),              # f32 output accumulator
    ]
    out_shape = jax.ShapeDtypeStruct((B, H, n_pad, D), q.dtype)

    if causal:
        # Flattened (qi, ki) schedule over only the useful causal tiles.
        q_hi = np.arange(nq, dtype=np.int64) * tq + (tq - 1)
        last_ki = np.clip((q_hi + offset) // tk, 0, nk - 1)
        steps_per_q = (last_ki + 1).astype(np.int64)
        total_steps = int(steps_per_q.sum())
        qi_sched = jnp.asarray(np.repeat(np.arange(nq, dtype=np.int32), steps_per_q))
        ki_sched = jnp.asarray(np.concatenate(
            [np.arange(n, dtype=np.int32) for n in steps_per_q]))

        def q_map(b, h, s, qi_ref, ki_ref):
            return (b, h, qi_ref[s], 0)

        def kv_map(b, h, s, qi_ref, ki_ref):
            return (b, h, ki_ref[s], 0)

        kernel = partial(_attend_kernel_causal, scale_log2e=scale_log2e,
                         block_q=tq, block_k=tk, offset=offset,
                         kv_valid=J, pad_kv=pad_kv, nk=nk)
        out = pl.pallas_call(
            kernel,
            out_shape=out_shape,
            grid_spec=pltpu.PrefetchScalarGridSpec(
                num_scalar_prefetch=2,
                grid=(B, H, total_steps),
                in_specs=[
                    pl.BlockSpec((1, 1, tq, D), q_map),
                    pl.BlockSpec((1, 1, tk, D), kv_map),
                    pl.BlockSpec((1, 1, tk, D), kv_map),
                ],
                out_specs=pl.BlockSpec((1, 1, tq, D), q_map),
                scratch_shapes=scratch_shapes,
            ),
            compiler_params=pltpu.CompilerParams(
                dimension_semantics=("parallel", "parallel", "arbitrary"),
                vmem_limit_bytes=vmem_limit,
            ),
        )(qi_sched, ki_sched, q, k, v)
    else:
        kernel = partial(_attend_kernel_dense, scale_log2e=scale_log2e,
                         block_k=tk, kv_valid=J, pad_kv=pad_kv)
        out = pl.pallas_call(
            kernel,
            out_shape=out_shape,
            grid_spec=pltpu.PrefetchScalarGridSpec(
                num_scalar_prefetch=0,
                grid=(B, H, nq, nk),
                in_specs=[
                    pl.BlockSpec((1, 1, tq, D), lambda b, h, i, j: (b, h, i, 0)),
                    pl.BlockSpec((1, 1, tk, D), lambda b, h, i, j: (b, h, j, 0)),
                    pl.BlockSpec((1, 1, tk, D), lambda b, h, i, j: (b, h, j, 0)),
                ],
                out_specs=pl.BlockSpec((1, 1, tq, D), lambda b, h, i, j: (b, h, i, 0)),
                scratch_shapes=scratch_shapes,
            ),
            compiler_params=pltpu.CompilerParams(
                dimension_semantics=("parallel", "parallel", "parallel", "arbitrary"),
                vmem_limit_bytes=vmem_limit,
            ),
        )(q, k, v)

    if n_pad != N:
        out = out[:, :, :N, :]
    return out


def attend_reference(q, k, v, *, causal=False, scale=None):
    """Plain-JAX reference mirroring the PyTorch forward (default config)."""
    D = q.shape[-1]
    scale = scale if scale is not None else D ** (-0.5)
    sim = jnp.einsum("bhid,bhjd->bhij", q, k) * scale
    if causal and q.shape[-2] > 1:
        i, j = sim.shape[-2:]
        row = jnp.arange(i)[:, None]
        col = jnp.arange(j)[None, :]
        sim = jnp.where(col > row + (j - i), -jnp.finfo(jnp.float32).max, sim)
    attn = jax.nn.softmax(sim.astype(jnp.float32), axis=-1).astype(q.dtype)
    return jnp.einsum("bhij,bhjd->bhid", attn, v)


if __name__ == "__main__":
    key = jax.random.PRNGKey(0)
    keys = jax.random.split(key, 12)

    # 1) Small non-causal check: batch=2, heads=4, seq=8, head_dim=32.
    B, H, N, D = 2, 4, 8, 32
    q = jax.random.normal(keys[0], (B, H, N, D), dtype=jnp.float32)
    k = jax.random.normal(keys[1], (B, H, N, D), dtype=jnp.float32)
    v = jax.random.normal(keys[2], (B, H, N, D), dtype=jnp.float32)
    out = jax.block_until_ready(attend(q, k, v, causal=False))
    ref = attend_reference(q, k, v, causal=False)
    assert out.shape == (B, H, N, D)
    assert jnp.allclose(out, ref, atol=2e-3, rtol=2e-3), "non-causal mismatch"

    # 2) Multi-tile causal check: exercises the flattened causal schedule,
    #    the online softmax across kv tiles and the diagonal-straddling mask.
    B2, H2, N2, D2 = 1, 2, 64, 32
    q2 = jax.random.normal(keys[3], (B2, H2, N2, D2), dtype=jnp.float32)
    k2 = jax.random.normal(keys[4], (B2, H2, N2, D2), dtype=jnp.float32)
    v2 = jax.random.normal(keys[5], (B2, H2, N2, D2), dtype=jnp.float32)
    out2 = jax.block_until_ready(
        attend(q2, k2, v2, causal=True, block_q=16, block_k=16))
    ref2 = attend_reference(q2, k2, v2, causal=True)
    assert jnp.allclose(out2, ref2, atol=2e-3, rtol=2e-3), "causal mismatch"

    # 3) Non-divisible cross-attention (N=12, J=20): exercises q/kv padding
    #    and the padded-key mask path (non-causal).
    B3, H3, N3, J3, D3 = 1, 2, 12, 20, 32
    q3 = jax.random.normal(keys[6], (B3, H3, N3, D3), dtype=jnp.float32)
    k3 = jax.random.normal(keys[7], (B3, H3, J3, D3), dtype=jnp.float32)
    v3 = jax.random.normal(keys[8], (B3, H3, J3, D3), dtype=jnp.float32)
    out3 = jax.block_until_ready(attend(q3, k3, v3, causal=False))
    ref3 = attend_reference(q3, k3, v3, causal=False)
    assert jnp.allclose(out3, ref3, atol=2e-3, rtol=2e-3), "padded mismatch"

    # 4) Non-divisible causal multi-tile (N=J=40, blocks=16): flattened causal
    #    schedule + padded keys + padded query rows sliced off.
    B4, H4, N4, D4 = 1, 1, 40, 32
    q4 = jax.random.normal(keys[9], (B4, H4, N4, D4), dtype=jnp.float32)
    k4 = jax.random.normal(keys[10], (B4, H4, N4, D4), dtype=jnp.float32)
    v4 = jax.random.normal(keys[11], (B4, H4, N4, D4), dtype=jnp.float32)
    out4 = jax.block_until_ready(
        attend(q4, k4, v4, causal=True, block_q=16, block_k=16))
    ref4 = attend_reference(q4, k4, v4, causal=True)
    assert jnp.allclose(out4, ref4, atol=2e-3, rtol=2e-3), "padded causal mismatch"

    print("KERNEL_OK")
</pallas_src>

<mosaic_0001>
module attributes {stable_mosaic.version = 11 : i64} {
  func.func @_attend_kernel_dense(%arg0: i32, %arg1: i32, %arg2: i32, %arg3: i32, %arg4: memref<1x1x8x32xf32, #tpu.memory_space<vmem>>, %arg5: memref<1x1x8x32xf32, #tpu.memory_space<vmem>>, %arg6: memref<1x1x8x32xf32, #tpu.memory_space<vmem>>, %arg7: memref<1x1x8x32xf32, #tpu.memory_space<vmem>>, %arg8: memref<8x32xf32, #tpu.memory_space<vmem>>, %arg9: memref<8x128xf32, #tpu.memory_space<vmem>>, %arg10: memref<8x128xf32, #tpu.memory_space<vmem>>, %arg11: memref<8x32xf32, #tpu.memory_space<vmem>>) attributes {dimension_semantics = [#tpu.dimension_semantics<parallel>, #tpu.dimension_semantics<parallel>, #tpu.dimension_semantics<parallel>, #tpu.dimension_semantics<arbitrary>], iteration_bounds = array<i64: 2, 4, 1, 1>, scalar_prefetch = 0 : i64, scratch_operands = 4 : i64, tpu.core_type = #tpu.core_type<tc>, window_params = [{transform_indices = @transform_0, window_bounds = array<i64: 1, 1, 8, 32>}, {transform_indices = @transform_1, window_bounds = array<i64: 1, 1, 8, 32>}, {transform_indices = @transform_2, window_bounds = array<i64: 1, 1, 8, 32>}, {transform_indices = @transform_3, window_bounds = array<i64: 1, 1, 8, 32>}]} {
    %c0_i32 = arith.constant 0 : i32
    %0 = arith.cmpi eq, %arg3, %c0_i32 : i32
    %1 = arith.extui %0 : i1 to i32
    %c0_i32_0 = arith.constant 0 : i32
    %2 = arith.cmpi ne, %1, %c0_i32_0 : i32
    scf.if %2 {
      %c0_27 = arith.constant 0 : index
      %c0_28 = arith.constant 0 : index
      %c0_29 = arith.constant 0 : index
      %c0_30 = arith.constant 0 : index
      %38 = vector.load %arg4[%c0_27, %c0_28, %c0_29, %c0_30] : memref<1x1x8x32xf32, #tpu.memory_space<vmem>>, vector<1x1x8x32xf32>
      %39 = vector.shape_cast %38 : vector<1x1x8x32xf32> to vector<8x32xf32>
      %cst_31 = arith.constant 0.255034864 : f32
      %40 = vector.broadcast %cst_31 : f32 to vector<8x32xf32>
      %41 = arith.mulf %39, %40 : vector<8x32xf32>
      %c0_32 = arith.constant 0 : index
      %c0_33 = arith.constant 0 : index
      %42 = vector.load %arg8[%c0_32, %c0_33] : memref<8x32xf32, #tpu.memory_space<vmem>>, vector<8x32xf32>
      tpu.vector_store %arg8[%c0_32, %c0_33], %41 {strides = array<i32>} : memref<8x32xf32, #tpu.memory_space<vmem>>, vector<8x32xf32>,
      %cst_34 = arith.constant 0xFF800000 : f32
      %43 = vector.broadcast %cst_34 : f32 to vector<8x128xf32>
      %c0_35 = arith.constant 0 : index
      %c0_36 = arith.constant 0 : index
      %44 = vector.load %arg9[%c0_35, %c0_36] : memref<8x128xf32, #tpu.memory_space<vmem>>, vector<8x128xf32>
      tpu.vector_store %arg9[%c0_35, %c0_36], %43 {strides = array<i32>} : memref<8x128xf32, #tpu.memory_space<vmem>>, vector<8x128xf32>,
      %cst_37 = arith.constant 0.000000e+00 : f32
      %45 = vector.broadcast %cst_37 : f32 to vector<8x128xf32>
      %c0_38 = arith.constant 0 : index
      %c0_39 = arith.constant 0 : index
      %46 = vector.load %arg10[%c0_38, %c0_39] : memref<8x128xf32, #tpu.memory_space<vmem>>, vector<8x128xf32>
      tpu.vector_store %arg10[%c0_38, %c0_39], %45 {strides = array<i32>} : memref<8x128xf32, #tpu.memory_space<vmem>>, vector<8x128xf32>,
      %cst_40 = arith.constant 0.000000e+00 : f32
      %47 = vector.broadcast %cst_40 : f32 to vector<8x32xf32>
      %c0_41 = arith.constant 0 : index
      %c0_42 = arith.constant 0 : index
      %48 = vector.load %arg11[%c0_41, %c0_42] : memref<8x32xf32, #tpu.memory_space<vmem>>, vector<8x32xf32>
      tpu.vector_store %arg11[%c0_41, %c0_42], %47 {strides = array<i32>} : memref<8x32xf32, #tpu.memory_space<vmem>>, vector<8x32xf32>,
    } else {
    }
    %c0 = arith.constant 0 : index
    %c0_1 = arith.constant 0 : index
    %3 = vector.load %arg8[%c0, %c0_1] : memref<8x32xf32, #tpu.memory_space<vmem>>, vector<8x32xf32>
    %c0_2 = arith.constant 0 : index
    %c0_3 = arith.constant 0 : index
    %c0_4 = arith.constant 0 : index
    %c0_5 = arith.constant 0 : index
    %4 = vector.load %arg5[%c0_2, %c0_3, %c0_4, %c0_5] : memref<1x1x8x32xf32, #tpu.memory_space<vmem>>, vector<1x1x8x32xf32>
    %5 = vector.shape_cast %4 : vector<1x1x8x32xf32> to vector<8x32xf32>
    %c0_6 = arith.constant 0 : index
    %c0_7 = arith.constant 0 : index
    %c0_8 = arith.constant 0 : index
    %c0_9 = arith.constant 0 : index
    %6 = vector.load %arg6[%c0_6, %c0_7, %c0_8, %c0_9] : memref<1x1x8x32xf32, #tpu.memory_space<vmem>>, vector<1x1x8x32xf32>
    %7 = vector.shape_cast %6 : vector<1x1x8x32xf32> to vector<8x32xf32>
    %cst = arith.constant dense<0.000000e+00> : vector<8x8xf32>
    %8 = tpu.matmul %3, %5, %cst {dimension_numbers = #tpu.dot_dimension_numbers<[1], [1], [0], [0], [0, 0, 1, 0], [], []>} : vector<8x32xf32>, vector<8x32xf32>, vector<8x8xf32> -> vector<8x8xf32>
    %c0_10 = arith.constant 0 : index
    %c0_11 = arith.constant 0 : index
    %9 = vector.load %arg9[%c0_10, %c0_11] : memref<8x128xf32, #tpu.memory_space<vmem>>, vector<8x128xf32>
    %cst_12 = arith.constant dense<0xFF800000> : vector<8xf32>
    %10 = vector.multi_reduction <maximumf>, %8, %cst_12 [1] : vector<8x8xf32> to vector<8xf32>
    %11 = vector.shape_cast %10 : vector<8xf32> to vector<8x1xf32>
    %12 = vector.broadcast %11 : vector<8x1xf32> to vector<8x128xf32>
    %13 = arith.maximumf %9, %12 : vector<8x128xf32>
    %14 = arith.subf %9, %13 : vector<8x128xf32>
    %15 = math.exp2 %14 : vector<8x128xf32>
    %16 = vector.extract_strided_slice %13 {offsets = [0, 0], sizes = [8, 1], strides = [1, 1]} : vector<8x128xf32> to vector<8x1xf32>
    %17 = vector.broadcast %16 : vector<8x1xf32> to vector<8x8xf32>
    %18 = arith.subf %8, %17 : vector<8x8xf32>
    %19 = math.exp2 %18 : vector<8x8xf32>
    %c0_13 = arith.constant 0 : index
    %c0_14 = arith.constant 0 : index
    %20 = vector.load %arg10[%c0_13, %c0_14] : memref<8x128xf32, #tpu.memory_space<vmem>>, vector<8x128xf32>
    %21 = arith.mulf %15, %20 : vector<8x128xf32>
    %cst_15 = arith.constant dense<0.000000e+00> : vector<8xf32>
    %22 = vector.multi_reduction <add>, %19, %cst_15 [1] : vector<8x8xf32> to vector<8xf32>
    %23 = vector.shape_cast %22 : vector<8xf32> to vector<8x1xf32>
    %24 = vector.broadcast %23 : vector<8x1xf32> to vector<8x128xf32>
    %25 = arith.addf %21, %24 : vector<8x128xf32>
    %c0_16 = arith.constant 0 : index
    %c0_17 = arith.constant 0 : index
    %26 = vector.load %arg10[%c0_16, %c0_17] : memref<8x128xf32, #tpu.memory_space<vmem>>, vector<8x128xf32>
    tpu.vector_store %arg10[%c0_16, %c0_17], %25 {strides = array<i32>} : memref<8x128xf32, #tpu.memory_space<vmem>>, vector<8x128xf32>,
    %27 = vector.extract_strided_slice %15 {offsets = [0, 0], sizes = [8, 1], strides = [1, 1]} : vector<8x128xf32> to vector<8x1xf32>
    %c0_18 = arith.constant 0 : index
    %c0_19 = arith.constant 0 : index
    %28 = vector.load %arg11[%c0_18, %c0_19] : memref<8x32xf32, #tpu.memory_space<vmem>>, vector<8x32xf32>
    %29 = vector.broadcast %27 : vector<8x1xf32> to vector<8x32xf32>
    %30 = arith.mulf %29, %28 : vector<8x32xf32>
    %cst_20 = arith.constant dense<0.000000e+00> : vector<8x32xf32>
    %31 = tpu.matmul %19, %7, %cst_20 {dimension_numbers = #tpu.dot_dimension_numbers<[1], [0], [0], [1], [0, 0, 1, 1], [], []>} : vector<8x8xf32>, vector<8x32xf32>, vector<8x32xf32> -> vector<8x32xf32>
    %32 = arith.addf %30, %31 : vector<8x32xf32>
    %c0_21 = arith.constant 0 : index
    %c0_22 = arith.constant 0 : index
    %33 = vector.load %arg11[%c0_21, %c0_22] : memref<8x32xf32, #tpu.memory_space<vmem>>, vector<8x32xf32>
    tpu.vector_store %arg11[%c0_21, %c0_22], %32 {strides = array<i32>} : memref<8x32xf32, #tpu.memory_space<vmem>>, vector<8x32xf32>,
    %c0_23 = arith.constant 0 : index
    %c0_24 = arith.constant 0 : index
    %34 = vector.load %arg9[%c0_23, %c0_24] : memref<8x128xf32, #tpu.memory_space<vmem>>, vector<8x128xf32>
    tpu.vector_store %arg9[%c0_23, %c0_24], %13 {strides = array<i32>} : memref<8x128xf32, #tpu.memory_space<vmem>>, vector<8x128xf32>,
    %c0_i32_25 = arith.constant 0 : i32
    %35 = arith.cmpi eq, %arg3, %c0_i32_25 : i32
    %36 = arith.extui %35 : i1 to i32
    %c0_i32_26 = arith.constant 0 : i32
    %37 = arith.cmpi ne, %36, %c0_i32_26 : i32
    scf.if %37 {
      %c0_27 = arith.constant 0 : index
      %c0_28 = arith.constant 0 : index
      %38 = vector.load %arg10[%c0_27, %c0_28] : memref<8x128xf32, #tpu.memory_space<vmem>>, vector<8x128xf32>
      %39 = tpu.reciprocal %38 {approx = true} : vector<8x128xf32> -> vector<8x128xf32>
      %c0_29 = arith.constant 0 : index
      %c0_30 = arith.constant 0 : index
      %40 = vector.load %arg11[%c0_29, %c0_30] : memref<8x32xf32, #tpu.memory_space<vmem>>, vector<8x32xf32>
      %41 = vector.extract_strided_slice %39 {offsets = [0, 0], sizes = [8, 1], strides = [1, 1]} : vector<8x128xf32> to vector<8x1xf32>
      %42 = vector.broadcast %41 : vector<8x1xf32> to vector<8x32xf32>
      %43 = arith.mulf %40, %42 : vector<8x32xf32>
      %c0_31 = arith.constant 0 : index
      %c0_32 = arith.constant 0 : index
      %c0_33 = arith.constant 0 : index
      %c0_34 = arith.constant 0 : index
      %44 = vector.load %arg7[%c0_31, %c0_32, %c0_33, %c0_34] : memref<1x1x8x32xf32, #tpu.memory_space<vmem>>, vector<1x1x8x32xf32>
      %45 = vector.shape_cast %44 : vector<1x1x8x32xf32> to vector<8x32xf32>
      %46 = vector.shape_cast %43 : vector<8x32xf32> to vector<1x1x8x32xf32>
      tpu.vector_store %arg7[%c0_31, %c0_32, %c0_33, %c0_34], %46 {strides = array<i32>} : memref<1x1x8x32xf32, #tpu.memory_space<vmem>>, vector<1x1x8x32xf32>,
    } else {
    }
    return
  }
  func.func @transform_0(%arg0: i32, %arg1: i32, %arg2: i32, %arg3: i32) -> (i32, i32, i32, i32) {
    %c0_i32 = arith.constant 0 : i32
    %c0_i32_0 = arith.constant 0 : i32
    return %arg0, %arg1, %arg2, %c0_i32 : i32, i32, i32, i32
  }
  func.func @transform_1(%arg0: i32, %arg1: i32, %arg2: i32, %arg3: i32) -> (i32, i32, i32, i32) {
    %c0_i32 = arith.constant 0 : i32
    %c0_i32_0 = arith.constant 0 : i32
    return %arg0, %arg1, %arg3, %c0_i32 : i32, i32, i32, i32
  }
  func.func @transform_2(%arg0: i32, %arg1: i32, %arg2: i32, %arg3: i32) -> (i32, i32, i32, i32) {
    %c0_i32 = arith.constant 0 : i32
    %c0_i32_0 = arith.constant 0 : i32
    return %arg0, %arg1, %arg3, %c0_i32 : i32, i32, i32, i32
  }
  func.func @transform_3(%arg0: i32, %arg1: i32, %arg2: i32, %arg3: i32) -> (i32, i32, i32, i32) {
    %c0_i32 = arith.constant 0 : i32
    %c0_i32_0 = arith.constant 0 : i32
    return %arg0, %arg1, %arg2, %c0_i32 : i32, i32, i32, i32
  }
}

</mosaic_0001>

<llo_original>
// kernel: tpu_custom_call.1
$region0: #{tpu_custom_call.1}
  #allocation0 [shape = 'u32[]', space=smem, size = 0x4, offset = 0x4, fixed_abs, tag = 'smem constant byte address 0x4 - core index']
  #allocation1 [shape = 'u32[144,128]{1,0:T(1,128)}', space=vmem, size = 0x12000, scoped, tag = 'internal scratch']
  #allocation2 [shape = 'f32[8,32]{1,0:T(8,128)}', space=vmem, size = 0x1000, scoped, tag = 'scratch operand']
  #allocation3 [shape = 'f32[8,128]{1,0:T(8,128)}', space=vmem, size = 0x1000, scoped, tag = 'scratch operand']
  #allocation4 [shape = 'f32[8,128]{1,0:T(8,128)}', space=vmem, size = 0x1000, scoped, tag = 'scratch operand']
  #allocation5 [shape = 'f32[8,32]{1,0:T(8,128)}', space=vmem, size = 0x1000, scoped, tag = 'scratch operand']
  %s0 = inlined_call_operand.hbm [shape: f32[2,4,8,32], index: 0, kind: input, shape index: {}]
  %s1 = inlined_call_operand.hbm [shape: f32[2,4,8,32], index: 1, kind: input, shape index: {}]
  %s2 = inlined_call_operand.hbm [shape: f32[2,4,8,32], index: 2, kind: input, shape index: {}]
  %s3 = inlined_call_operand.hbm [shape: f32[2,4,8,32], index: 3, kind: output, shape index: {}]
  %s4 = sld [smem:[#allocation0]]
  $region65: #{tpu_custom_call.1} parent=0
    _
  %s6 = ssub.s32 1, %s4
  %s7 = scalar_select 0, %s6, %s4
  $region1: #{tpu_custom_call.1} parent=0
    #allocation6 [shape = 'u8[8192]{0}', space=vmem, size = 0x2000, scoped, tag = 'input window, operand 0']
    #allocation7 [shape = 's32[2]{0}', space=sflag, size = 0x8, scoped, tag = 'scoped memory for tpu_custom_call.1']
    #allocation8 [shape = 's32[2]{0}', space=sflag, size = 0x8, scoped, tag = 'scoped memory for tpu_custom_call.1']
    #allocation9 [shape = 'u8[8192]{0}', space=vmem, size = 0x2000, scoped, tag = 'input window, operand 1']
    #allocation10 [shape = 's32[2]{0}', space=sflag, size = 0x8, scoped, tag = 'scoped memory for tpu_custom_call.1']
    #allocation11 [shape = 'u8[8192]{0}', space=vmem, size = 0x2000, scoped, tag = 'input window, operand 2']
    #allocation12 [shape = 'u8[8192]{0}', space=vmem, size = 0x2000, scoped, tag = 'output window, operand 0']
    %8 = vsyncpa [#allocation7], 0
    %s9 = scalar_lea.sflag [#allocation7], 1
    %10 = vsyncpa %s9, 0
    %11 = vsyncpa [#allocation10], 0
    %s12 = scalar_lea.sflag [#allocation10], 1
    %13 = vsyncpa %s12, 0
    %14 = vsyncpa [#allocation8], 0
    %s15 = scalar_lea.sflag [#allocation8], 1
    %16 = vsyncpa %s15, 0
    loop: start=0, step=1, limit=10
    $region2: #{tpu_custom_call.1} parent=1 // loop_pre_header
      _
    $region3: #{tpu_custom_call.1} parent=1 // loop_header
      %s18 = sphi 0, %s22
      %p19 = scmp.ge.s32.totalorder %s18, 10
      %s25 = sphi 0, %s51
      %s26 = sphi 0, %s47
      %s27 = sphi 0, %s43
      %s28 = sphi 0, %s39
      %s29 = sphi 0, %s25
      %s30 = sphi 0, %s26
      %s31 = sphi 0, %s27
      %s32 = sphi 0, %s28
      %s33 = sphi 0, %s29
      %s34 = sphi 0, %s30
      %s35 = sphi 0, %s31
      %s36 = sphi 0, %s32
      %s58 = sphi 0, %s60
      %s61 = sphi 0, %s58
      %s62 = sphi 0, %s61
      %s78 = sphi 0, %s62
      %s88 = sphi 0, %s90
      %s91 = sphi 0, %s88
      %s92 = sphi 0, %s91
      %s108 = sphi 0, %s92
      %s118 = sphi 0, %s120
      %s121 = sphi 0, %s118
      %s122 = sphi 0, %s121
      %s138 = sphi 0, %s122
      %s148 = sphi 0, %s150
      %s151 = sphi 0, %s148
      %s152 = sphi 0, %s151
      %s168 = sphi 0, %s152
    $region4: #{tpu_custom_call.1} parent=1 // loop_header_branch
      %21 = sbr.rel (%p19) target = $region8
    $region5: #{tpu_custom_call.1} parent=1 // loop_body
      %s23 = ssub.s32 %s18, 1
      %s24 = ssub.s32 %s18, 2
      %s37 = sadd.s32 1, %s28
      %p38 = scmp.ge.s32.totalorder %s37, 1
      %s39 = scalar_select %p38, 0, %s37
      %s40 = sadd.s32 1, %s27
      %s41 = scalar_select %p38, %s40, %s27
      %p42 = scmp.ge.s32.totalorder %s41, 1
      %s43 = scalar_select %p42, 0, %s41
      %s44 = sadd.s32 1, %s26
      %s45 = scalar_select %p42, %s44, %s26
      %p46 = scmp.ge.s32.totalorder %s45, 4
      %s47 = scalar_select %p46, 0, %s45
      %s48 = sadd.s32 1, %s25
      %s49 = scalar_select %p46, %s48, %s25
      %p50 = scmp.ge.s32.totalorder %s49, 2
      %s51 = scalar_select %p50, 0, %s49
      %s52 = ssub.s32 %s25, %s51
      %s53 = ssub.s32 %s26, %s47
      %s54 = sor.u32 %s52, %s53
      %s55 = ssub.s32 %s27, %s43
      %s56 = sor.u32 %s54, %s55
      %p57 = scmp.eq.s32.totalorder %s56, 0
      %s59 = sadd.s32 %s58, 1
      %s60 = scalar_select %p57, %s58, %s59
      %p63 = pneg %p57
      %p64 = scmp.eq.s32.totalorder %s18, 7
      %p65 = por %p63, %p64
      %p66 = scmp.ne.s32.totalorder %s58, %s61
      %p67 = scmp.eq.s32.totalorder %s18, 0
      %p68 = por %p66, %p67
      %p69 = scmp.ne.s32.totalorder %s58, %s61
      %p70 = scmp.eq.s32.totalorder %s23, 7
      %p71 = por %p69, %p70
      %p72 = scmp.ne.s32.totalorder %s61, %s62
      %p73 = scmp.eq.s32.totalorder %s23, 0
      %p74 = por %p72, %p73
      %p75 = scmp.ne.s32.totalorder %s61, %s62
      %p76 = scmp.eq.s32.totalorder %s24, 7
      %p77 = por %p75, %p76
      %p79 = scmp.ne.s32.totalorder %s62, %s78
      %p80 = scmp.eq.s32.totalorder %s24, 0
      %p81 = por %p79, %p80
      %s82 = ssub.s32 %s25, %s51
      %s83 = ssub.s32 %s26, %s47
      %s84 = sor.u32 %s82, %s83
      %s85 = ssub.s32 %s28, %s39
      %s86 = sor.u32 %s84, %s85
      %p87 = scmp.eq.s32.totalorder %s86, 0
      %s89 = sadd.s32 %s88, 1
      %s90 = scalar_select %p87, %s88, %s89
      %p93 = pneg %p87
      %p94 = scmp.eq.s32.totalorder %s18, 7
      %p95 = por %p93, %p94
      %p96 = scmp.ne.s32.totalorder %s88, %s91
      %p97 = scmp.eq.s32.totalorder %s18, 0
      %p98 = por %p96, %p97
      %p99 = scmp.ne.s32.totalorder %s88, %s91
      %p100 = scmp.eq.s32.totalorder %s23, 7
      %p101 = por %p99, %p100
      %p102 = scmp.ne.s32.totalorder %s91, %s92
      %p103 = scmp.eq.s32.totalorder %s23, 0
      %p104 = por %p102, %p103
      %p105 = scmp.ne.s32.totalorder %s91, %s92
      %p106 = scmp.eq.s32.totalorder %s24, 7
      %p107 = por %p105, %p106
      %p109 = scmp.ne.s32.totalorder %s92, %s108
      %p110 = scmp.eq.s32.totalorder %s24, 0
      %p111 = por %p109, %p110
      %s112 = ssub.s32 %s25, %s51
      %s113 = ssub.s32 %s26, %s47
      %s114 = sor.u32 %s112, %s113
      %s115 = ssub.s32 %s28, %s39
      %s116 = sor.u32 %s114, %s115
      %p117 = scmp.eq.s32.totalorder %s116, 0
      %s119 = sadd.s32 %s118, 1
      %s120 = scalar_select %p117, %s118, %s119
      %p123 = pneg %p117
      %p124 = scmp.eq.s32.totalorder %s18, 7
      %p125 = por %p123, %p124
      %p126 = scmp.ne.s32.totalorder %s118, %s121
      %p127 = scmp.eq.s32.totalorder %s18, 0
      %p128 = por %p126, %p127
      %p129 = scmp.ne.s32.totalorder %s118, %s121
      %p130 = scmp.eq.s32.totalorder %s23, 7
      %p131 = por %p129, %p130
      %p132 = scmp.ne.s32.totalorder %s121, %s122
      %p133 = scmp.eq.s32.totalorder %s23, 0
      %p134 = por %p132, %p133
      %p135 = scmp.ne.s32.totalorder %s121, %s122
      %p136 = scmp.eq.s32.totalorder %s24, 7
      %p137 = por %p135, %p136
      %p139 = scmp.ne.s32.totalorder %s122, %s138
      %p140 = scmp.eq.s32.totalorder %s24, 0
      %p141 = por %p139, %p140
      %s142 = ssub.s32 %s25, %s51
      %s143 = ssub.s32 %s26, %s47
      %s144 = sor.u32 %s142, %s143
      %s145 = ssub.s32 %s27, %s43
      %s146 = sor.u32 %s144, %s145
      %p147 = scmp.eq.s32.totalorder %s146, 0
      %s149 = sadd.s32 %s148, 1
      %s150 = scalar_select %p147, %s148, %s149
      %p153 = pneg %p147
      %p154 = scmp.eq.s32.totalorder %s18, 7
      %p155 = por %p153, %p154
      %p156 = scmp.ne.s32.totalorder %s148, %s151
      %p157 = scmp.eq.s32.totalorder %s18, 0
      %p158 = por %p156, %p157
      %p159 = scmp.ne.s32.totalorder %s148, %s151
      %p160 = scmp.eq.s32.totalorder %s23, 7
      %p161 = por %p159, %p160
      %p162 = scmp.ne.s32.totalorder %s151, %s152
      %p163 = scmp.eq.s32.totalorder %s23, 0
      %p164 = por %p162, %p163
      %p165 = scmp.ne.s32.totalorder %s151, %s152
      %p166 = scmp.eq.s32.totalorder %s24, 7
      %p167 = por %p165, %p166
      %p169 = scmp.ne.s32.totalorder %s152, %s168
      %p170 = scmp.eq.s32.totalorder %s24, 0
      %p171 = por %p169, %p170
      %p172 = scmp.le.s32.totalorder 1, %s18
      %p173 = scmp.lt.s32.totalorder %s18, 9
      %p174 = pnand %p172, %p173
      %p175 = pneg %p174
      // Predicated region
      $region9: #{tpu_custom_call.1} parent=5 // pred_check
        _
      $region10: #{tpu_custom_call.1} parent=5 // pred_check_branch
        %177 = sbr.rel (%p174) target = $region12
      $region11: #{tpu_custom_call.1} parent=5 // pred_region
        %s178 = ssub.s32 %s18, 1
      $region12: #{tpu_custom_call.1} parent=5 // pred_fallthru
        _
      %p179 = scmp.lt.s32.totalorder %s18, 8
      // Predicated region
      $region13: #{tpu_custom_call.1} parent=5 // pred_check
        %p180 = pneg %p179
      $region14: #{tpu_custom_call.1} parent=5 // pred_check_branch
        %182 = sbr.rel (%p180) target = $region16
      $region15: #{tpu_custom_call.1} parent=5 // pred_region
        // Predicated region
        $region17: #{tpu_custom_call.1} parent=15 // pred_check
          %p183 = pneg %p68
        $region18: #{tpu_custom_call.1} parent=15 // pred_check_branch
          %185 = sbr.rel (%p183) target = $region20
        $region19: #{tpu_custom_call.1} parent=15 // pred_region
          %s186 = sand.u32 %s58, 1
          %s187 = scalar_lea.sflag [#allocation7], %s186
          %s188 = sand.u32 %s58, 1
          %s189 = smul.addr %s188, 8
          %s190 = scalar_lea.vmem [#allocation6], %s189
          %s192 = ssub.s32 128, 128
          %193 = vsyncadd %s187, %s192
          %s194 = sadd.s32 %s27, %s26
          %s195 = smul.addr %s25, 4
          %s196 = sadd.s32 %s194, %s195
          %s197 = smul.addr %s196, 128
          %s198 = scalar_lea.hbm %s0, %s197
          %s200 = sshll.u32 %s190, 4
          %s201 = int_to_ptr.vmem [resolvable:$true] %s200
          %203 = dma.hbm_to_vmem [thread:$0]  %s198, 128, %s201, %s187
        $region20: #{tpu_custom_call.1} parent=15 // pred_fallthru
          _
        // Predicated region
        $region21: #{tpu_custom_call.1} parent=15 // pred_check
          %p204 = pneg %p98
        $region22: #{tpu_custom_call.1} parent=15 // pred_check_branch
          %206 = sbr.rel (%p204) target = $region24
        $region23: #{tpu_custom_call.1} parent=15 // pred_region
          %s207 = sand.u32 %s18, 1
          %s208 = scalar_lea.sflag [#allocation10], %s207
          %s209 = sand.u32 %s88, 1
          %s210 = smul.addr %s209, 8
          %s211 = scalar_lea.vmem [#allocation9], %s210
          %s213 = ssub.s32 128, 128
          %214 = vsyncadd %s208, %s213
          %s215 = sadd.s32 %s28, %s26
          %s216 = smul.addr %s25, 4
          %s217 = sadd.s32 %s215, %s216
          %s218 = smul.addr %s217, 128
          %s219 = scalar_lea.hbm %s1, %s218
          %s221 = sshll.u32 %s211, 4
          %s222 = int_to_ptr.vmem [resolvable:$true] %s221
          %224 = dma.hbm_to_vmem [thread:$0]  %s219, 128, %s222, %s208
        $region24: #{tpu_custom_call.1} parent=15 // pred_fallthru
          _
        // Predicated region
        $region25: #{tpu_custom_call.1} parent=15 // pred_check
          %p225 = pneg %p128
        $region26: #{tpu_custom_call.1} parent=15 // pred_check_branch
          %227 = sbr.rel (%p225) target = $region28
        $region27: #{tpu_custom_call.1} parent=15 // pred_region
          %s228 = sand.u32 %s18, 1
          %s229 = scalar_lea.sflag [#allocation10], %s228
          %s230 = sand.u32 %s118, 1
          %s231 = smul.addr %s230, 8
          %s232 = scalar_lea.vmem [#allocation11], %s231
          %s234 = ssub.s32 128, 128
          %235 = vsyncadd %s229, %s234
          %s236 = sadd.s32 %s28, %s26
          %s237 = smul.addr %s25, 4
          %s238 = sadd.s32 %s236, %s237
          %s239 = smul.addr %s238, 128
          %s240 = scalar_lea.hbm %s2, %s239
          %s242 = sshll.u32 %s232, 4
          %s243 = int_to_ptr.vmem [resolvable:$true] %s242
          %245 = dma.hbm_to_vmem [thread:$0]  %s240, 128, %s243, %s229
        $region28: #{tpu_custom_call.1} parent=15 // pred_fallthru
          _
      $region16: #{tpu_custom_call.1} parent=5 // pred_fallthru
        _
      %p246 = scmp.le.s32.totalorder 1, %s18
      %p247 = scmp.lt.s32.totalorder %s18, 9
      %p248 = pnand %p246, %p247
      %p249 = pneg %p248
      // Predicated region
      $region29: #{tpu_custom_call.1} parent=5 // pred_check
        _
      $region30: #{tpu_custom_call.1} parent=5 // pred_check_branch
        %251 = sbr.rel (%p248) target = $region32
      $region31: #{tpu_custom_call.1} parent=5 // pred_region
        %s252 = ssub.s32 %s18, 1
        %s253 = sand.u32 %s61, 1
        %s254 = scalar_lea.sflag [#allocation7], %s253
        %s255 = sand.u32 %s61, 1
        %s256 = smul.addr %s255, 8
        %s257 = scalar_lea.vmem [#allocation6], %s256
        // Predicated region
        $region33: #{tpu_custom_call.1} parent=31 // pred_check
          %p258 = pneg %p74
        $region34: #{tpu_custom_call.1} parent=31 // pred_check_branch
          %260 = sbr.rel (%p258) target = $region36
        $region35: #{tpu_custom_call.1} parent=31 // pred_region
          %261 = dma.done %s254, 128
        $region36: #{tpu_custom_call.1} parent=31 // pred_fallthru
          _
        %s262 = sand.u32 %s23, 1
        %s263 = scalar_lea.sflag [#allocation10], %s262
        %s264 = sand.u32 %s91, 1
        %s265 = smul.addr %s264, 8
        %s266 = scalar_lea.vmem [#allocation9], %s265
        // Predicated region
        $region37: #{tpu_custom_call.1} parent=31 // pred_check
          %p267 = pneg %p104
        $region38: #{tpu_custom_call.1} parent=31 // pred_check_branch
          %269 = sbr.rel (%p267) target = $region40
        $region39: #{tpu_custom_call.1} parent=31 // pred_region
          %270 = dma.done %s263, 128
        $region40: #{tpu_custom_call.1} parent=31 // pred_fallthru
          _
        %s271 = sand.u32 %s23, 1
        %s272 = scalar_lea.sflag [#allocation10], %s271
        %s273 = sand.u32 %s121, 1
        %s274 = smul.addr %s273, 8
        %s275 = scalar_lea.vmem [#allocation11], %s274
        // Predicated region
        $region41: #{tpu_custom_call.1} parent=31 // pred_check
          %p276 = pneg %p134
        $region42: #{tpu_custom_call.1} parent=31 // pred_check_branch
          %278 = sbr.rel (%p276) target = $region44
        $region43: #{tpu_custom_call.1} parent=31 // pred_region
          %279 = dma.done %s272, 128
        $region44: #{tpu_custom_call.1} parent=31 // pred_fallthru
          _
        %s280 = sand.u32 %s61, 1
        %s281 = scalar_lea.sflag [#allocation7], %s280
        %s282 = sand.u32 %s61, 1
        %s283 = smul.addr %s282, 8
        %s284 = scalar_lea.vmem [#allocation6], %s283
        %p285 = pneg %p74
        %p286 = pneg %p71
        %s287 = sand.u32 %s23, 1
        %s288 = scalar_lea.sflag [#allocation10], %s287
        %s289 = sand.u32 %s91, 1
        %s290 = smul.addr %s289, 8
        %s291 = scalar_lea.vmem [#allocation9], %s290
        %p292 = pneg %p104
        %p293 = pneg %p101
        %s294 = sand.u32 %s23, 1
        %s295 = scalar_lea.sflag [#allocation10], %s294
        %s296 = sand.u32 %s121, 1
        %s297 = smul.addr %s296, 8
        %s298 = scalar_lea.vmem [#allocation11], %s297
        %p299 = pneg %p134
        %p300 = pneg %p131
        %p301 = pneg %p164
        %p302 = pneg %p161
        %s303 = sand.u32 %s151, 1
        %s304 = scalar_lea.sflag [#allocation8], %s303
        %s305 = sand.u32 %s151, 1
        %s306 = smul.addr %s305, 8
        %s307 = scalar_lea.vmem [#allocation12], %s306
        %p308 = scmp.eq.s32.totalorder %s32, 0
        // Predicated region
        $region45: #{tpu_custom_call.1} parent=31 // pred_check
          %p309 = pneg %p308
        $region46: #{tpu_custom_call.1} parent=31 // pred_check_branch
          %311 = sbr.rel (%p309) target = $region48
        $region47: #{tpu_custom_call.1} parent=31 // pred_region
          %v312 = vld [vmem:[%s257] sm:$0xff]
          %v313 = vmul.f32 %v312, 0.25503486
          %vm314 = vcmask 261120
          %315 = vst.msk [vmem:[#allocation2] sm:$0xff] %vm314, %v313
          %316 = vst [vmem:[#allocation3] sm:$0xff] -inf
          %317 = vst [vmem:[#allocation4] sm:$0xff] 0.0
          %318 = vst.msk [vmem:[#allocation5] sm:$0xff] %vm314, 0.0
        $region48: #{tpu_custom_call.1} parent=31 // pred_fallthru
          _
        %v319 = vld [vmem:[#allocation2] sm:$0xff]
        %v320 = vld [vmem:[%s266] sm:$0xff]
        %v321 = vld [vmem:[%s275] sm:$0xff]
        %vm322 = vcmask 261120
        %v324 = vsel %vm322, %v319, 0
        %v327 = vsel %vm322, %v320, 0
        %329 = vmatprep.subr.mxu0 0.0
        %330 = vmatpush1.xpose.msra.mxu0 %v327
        %331 = vmatprep.subr.mxu0 0.0
        %332 = vmatpush1.xpose.msra.mxu0 0.0
        %333 = vmatprep.subr.mxu0 0.0
        %334 = vmatpush1.xpose.msra.mxu0 0.0
        %335 = vmatprep.subr.mxu0 0.0
        %336 = vmatpush1.xpose.msra.mxu0 0.0
        %337 = vmatprep.subr.mxu0 0.0
        %338 = vmatpush1.xpose.msra.mxu0 0.0
        %339 = vmatprep.subr.mxu0 0.0
        %340 = vmatpush1.xpose.msra.mxu0 0.0
        %341 = vmatprep.subr.mxu0 0.0
        %342 = vmatpush1.xpose.msra.mxu0 0.0
        %343 = vmatprep.subr.mxu0 0.0
        %344 = vmatpush1.xpose.msra.mxu0 0.0
        %345 = vmatprep.subr.mxu0 0.0
        %346 = vmatpush1.xpose.msra.mxu0 0.0
        %347 = vmatprep.subr.mxu0 0.0
        %348 = vmatpush1.xpose.msra.mxu0 0.0
        %349 = vmatprep.subr.mxu0 0.0
        %350 = vmatpush1.xpose.msra.mxu0 0.0
        %351 = vmatprep.subr.mxu0 0.0
        %352 = vmatpush1.xpose.msra.mxu0 0.0
        %353 = vmatprep.subr.mxu0 0.0
        %354 = vmatpush1.xpose.msra.mxu0 0.0
        %355 = vmatprep.subr.mxu0 0.0
        %356 = vmatpush1.xpose.msra.mxu0 0.0
        %357 = vmatprep.subr.mxu0 0.0
        %358 = vmatpush1.xpose.msra.mxu0 0.0
        %359 = vmatprep.subr.mxu0 0.0
        %360 = vmatpush1.xpose.msra.mxu0 0.0
        %361 = vmatprep.subr.mxu0 0.0
        %362 = vmatpush1.xpose.msra.mxu0 0.0
        %363 = vmatprep.subr.mxu0 0.0
        %364 = vmatpush1.xpose.msra.mxu0 0.0
        %365 = vmatprep.subr.mxu0 0.0
        %366 = vmatpush1.xpose.msra.mxu0 0.0
        %367 = vmatprep.subr.mxu0 0.0
        %368 = vmatpush1.xpose.msra.mxu0 0.0
        %369 = vmatprep.subr.mxu0 0.0
        %370 = vmatpush1.xpose.msra.mxu0 0.0
        %371 = vmatprep.subr.mxu0 0.0
        %372 = vmatpush1.xpose.msra.mxu0 0.0
        %373 = vmatprep.subr.mxu0 0.0
        %374 = vmatpush1.xpose.msra.mxu0 0.0
        %375 = vmatprep.subr.mxu0 0.0
        %376 = vmatpush1.xpose.msra.mxu0 0.0
        %377 = vmatprep.subr.mxu0 0.0
        %378 = vmatpush1.xpose.msra.mxu0 0.0
        %379 = vmatprep.subr.mxu0 0.0
        %380 = vmatpush1.xpose.msra.mxu0 0.0
        %381 = vmatprep.subr.mxu0 0.0
        %382 = vmatpush1.xpose.msra.mxu0 0.0
        %383 = vmatprep.subr.mxu0 0.0
        %384 = vmatpush1.xpose.msra.mxu0 0.0
        %385 = vmatprep.subr.mxu0 0.0
        %386 = vmatpush1.xpose.msra.mxu0 0.0
        %387 = vmatprep.subr.mxu0 0.0
        %388 = vmatpush1.xpose.msra.mxu0 0.0
        %389 = vmatprep.subr.mxu0 0.0
        %390 = vmatpush1.xpose.msra.mxu0 0.0
        %391 = vmatprep.subr.mxu0 0.0
        %392 = vmatpush1.xpose.msra.mxu0 0.0
        %393 = vmatprep.mubr.f32.mxu0 0.0
        %394 = vmatmul.mubr.f32.gmra.mrb[0].mxu0 %v324
        %v395 = vpop.f32.mrb[0].mxu0
        %v396 = vadd.f32 0.0, %v395
        %v397 = vpop.f32.mrb[0].mxu0
        %398 = vdwg.mxu0
        %v399 = vld [vmem:[#allocation3] sm:$0xff]
        %vm400 = vcmask 64512
        %v401 = vsel %vm400, %v396, -inf
        %402 = vmax.xlane.f32.xlu0 %v401
        %v403 = vpop.xlane.xlu0 %402
        %v404 = vmax.f32 %v399, %v403
        %v405 = vsub.f32 %v399, %v404
        %v406 = vpow.pop %v405
        %408 = vset.pattern.permute.xlu0 0
        %409 = vperm.xlu0 %408, %v404
        %v410 = vpop.permute.xlu0 %409
        %v412 = vsub.f32 %v396, %v410
        %v413 = vpow.pop %v412
        %v414 = vld [vmem:[#allocation4] sm:$0xff]
        %v415 = vmul.f32 %v406, %v414
        %v416 = vsel %vm400, %v413, 0.0
        %417 = vadd.xlane.f32.xlu0 %v416
        %v418 = vpop.xlane.xlu0 %417
        %v419 = vadd.f32 %v415, %v418
        %420 = vst [vmem:[#allocation4] sm:$0xff] %v419
        %v421 = vld [vmem:[#allocation5] sm:$0xff]
        %423 = vset.pattern.permute.xlu0 0
        %424 = vperm.xlu0 %423, %v406
        %v425 = vpop.permute.xlu0 %424
        %v427 = vmul.f32 %v425, %v421
        %v429 = vsel %vm400, %v413, 0
        %431 = vmatprep.subr.mxu0 0.0
        %432 = vmatpush1.msra.mxu0 %v321
        %433 = vmatprep.subr.mxu0 0.0
        %434 = vmatpush1.msra.mxu0 0.0
        %435 = vmatprep.subr.mxu0 0.0
        %436 = vmatpush1.msra.mxu0 0.0
        %437 = vmatprep.subr.mxu0 0.0
        %438 = vmatpush1.msra.mxu0 0.0
        %439 = vmatprep.subr.mxu0 0.0
        %440 = vmatpush1.msra.mxu0 0.0
        %441 = vmatprep.subr.mxu0 0.0
        %442 = vmatpush1.msra.mxu0 0.0
        %443 = vmatprep.subr.mxu0 0.0
        %444 = vmatpush1.msra.mxu0 0.0
        %445 = vmatprep.subr.mxu0 0.0
        %446 = vmatpush1.msra.mxu0 0.0
        %447 = vmatprep.subr.mxu0 0.0
        %448 = vmatpush1.msra.mxu0 0.0
        %449 = vmatprep.subr.mxu0 0.0
        %450 = vmatpush1.msra.mxu0 0.0
        %451 = vmatprep.subr.mxu0 0.0
        %452 = vmatpush1.msra.mxu0 0.0
        %453 = vmatprep.subr.mxu0 0.0
        %454 = vmatpush1.msra.mxu0 0.0
        %455 = vmatprep.subr.mxu0 0.0
        %456 = vmatpush1.msra.mxu0 0.0
        %457 = vmatprep.subr.mxu0 0.0
        %458 = vmatpush1.msra.mxu0 0.0
        %459 = vmatprep.subr.mxu0 0.0
        %460 = vmatpush1.msra.mxu0 0.0
        %461 = vmatprep.subr.mxu0 0.0
        %462 = vmatpush1.msra.mxu0 0.0
        %463 = vmatprep.subr.mxu0 0.0
        %464 = vmatpush1.msra.mxu0 0.0
        %465 = vmatprep.subr.mxu0 0.0
        %466 = vmatpush1.msra.mxu0 0.0
        %467 = vmatprep.subr.mxu0 0.0
        %468 = vmatpush1.msra.mxu0 0.0
        %469 = vmatprep.subr.mxu0 0.0
        %470 = vmatpush1.msra.mxu0 0.0
        %471 = vmatprep.subr.mxu0 0.0
        %472 = vmatpush1.msra.mxu0 0.0
        %473 = vmatprep.subr.mxu0 0.0
        %474 = vmatpush1.msra.mxu0 0.0
        %475 = vmatprep.subr.mxu0 0.0
        %476 = vmatpush1.msra.mxu0 0.0
        %477 = vmatprep.subr.mxu0 0.0
        %478 = vmatpush1.msra.mxu0 0.0
        %479 = vmatprep.subr.mxu0 0.0
        %480 = vmatpush1.msra.mxu0 0.0
        %481 = vmatprep.subr.mxu0 0.0
        %482 = vmatpush1.msra.mxu0 0.0
        %483 = vmatprep.subr.mxu0 0.0
        %484 = vmatpush1.msra.mxu0 0.0
        %485 = vmatprep.subr.mxu0 0.0
        %486 = vmatpush1.msra.mxu0 0.0
        %487 = vmatprep.subr.mxu0 0.0
        %488 = vmatpush1.msra.mxu0 0.0
        %489 = vmatprep.subr.mxu0 0.0
        %490 = vmatpush1.msra.mxu0 0.0
        %491 = vmatprep.subr.mxu0 0.0
        %492 = vmatpush1.msra.mxu0 0.0
        %493 = vmatprep.subr.mxu0 0.0
        %494 = vmatpush1.msra.mxu0 0.0
        %495 = vmatprep.mubr.f32.mxu0 0.0
        %496 = vmatmul.mubr.f32.gmra.mrb[0].mxu0 %v429
        %v497 = vpop.f32.mrb[0].mxu0
        %v498 = vadd.f32 0.0, %v497
        %v499 = vpop.f32.mrb[0].mxu0
        %500 = vdwg.mxu0
        %v501 = vadd.f32 %v427, %v498
        %502 = vst.msk [vmem:[#allocation5] sm:$0xff] %vm322, %v501
        %503 = vst [vmem:[#allocation3] sm:$0xff] %v404
        // Predicated region
        $region49: #{tpu_custom_call.1} parent=31 // pred_check
          %p504 = pneg %p308
        $region50: #{tpu_custom_call.1} parent=31 // pred_check_branch
          %506 = sbr.rel (%p504) target = $region52
        $region51: #{tpu_custom_call.1} parent=31 // pred_region
          %v507 = vld [vmem:[#allocation4] sm:$0xff]
          %v508 = vrcp.pop %v507
          %v509 = vld [vmem:[#allocation5] sm:$0xff]
          %511 = vset.pattern.permute.xlu0 0
          %512 = vperm.xlu0 %511, %v508
          %v513 = vpop.permute.xlu0 %512
          %v515 = vmul.f32 %v509, %v513
          %516 = vst.msk [vmem:[%s307] sm:$0xff] %vm322, %v515
        $region52: #{tpu_custom_call.1} parent=31 // pred_fallthru
          _
        %s517 = sand.u32 %s151, 1
        %s518 = scalar_lea.sflag [#allocation8], %s517
        %s519 = sand.u32 %s151, 1
        %s520 = smul.addr %s519, 8
        %s521 = scalar_lea.vmem [#allocation12], %s520
        // Predicated region
        $region53: #{tpu_custom_call.1} parent=31 // pred_check
          %p522 = pneg %p161
        $region54: #{tpu_custom_call.1} parent=31 // pred_check_branch
          %524 = sbr.rel (%p522) target = $region56
        $region55: #{tpu_custom_call.1} parent=31 // pred_region
          %s526 = ssub.s32 128, 128
          %527 = vsyncadd %s518, %s526
          %s528 = sadd.s32 %s31, %s30
          %s529 = smul.addr %s29, 4
          %s530 = sadd.s32 %s528, %s529
          %s531 = smul.addr %s530, 128
          %s532 = scalar_lea.hbm %s3, %s531
          %s534 = sshll.u32 %s521, 4
          %s535 = int_to_ptr.vmem [resolvable:$true] %s534
          %537 = dma.vmem_to_hbm [thread:$0]  %s535, 128, %s532, %s518
        $region56: #{tpu_custom_call.1} parent=31 // pred_fallthru
          _
      $region32: #{tpu_custom_call.1} parent=5 // pred_fallthru
        _
      %p538 = scmp.le.s32.totalorder 2, %s18
      // Predicated region
      $region57: #{tpu_custom_call.1} parent=5 // pred_check
        %p539 = pneg %p538
      $region58: #{tpu_custom_call.1} parent=5 // pred_check_branch
        %541 = sbr.rel (%p539) target = $region60
      $region59: #{tpu_custom_call.1} parent=5 // pred_region
        %s542 = ssub.s32 %s18, 2
        // Predicated region
        $region61: #{tpu_custom_call.1} parent=59 // pred_check
          %p543 = pneg %p167
        $region62: #{tpu_custom_call.1} parent=59 // pred_check_branch
          %545 = sbr.rel (%p543) target = $region64
        $region63: #{tpu_custom_call.1} parent=59 // pred_region
          %s546 = sand.u32 %s152, 1
          %s547 = scalar_lea.sflag [#allocation8], %s546
          %s548 = sand.u32 %s152, 1
          %s549 = smul.addr %s548, 8
          %s550 = scalar_lea.vmem [#allocation12], %s549
          %551 = dma.done %s547, 128
        $region64: #{tpu_custom_call.1} parent=59 // pred_fallthru
          _
      $region60: #{tpu_custom_call.1} parent=5 // pred_fallthru
        _
    $region6: #{tpu_custom_call.1} parent=1 // loop_footer
      %s22 = sadd.s32 1, %s18
    $region7: #{tpu_custom_call.1} parent=1 // loop_footer_branch
      %17 = sbr.rel target = $region3
    $region8: #{tpu_custom_call.1} parent=1 // loop_exit
      _
    %552 = vsyncpa [#allocation7], 1
    %s553 = scalar_lea.sflag [#allocation7], 1
    %554 = vsyncpa %s553, 1
    %555 = vsyncpa [#allocation10], 1
    %s556 = scalar_lea.sflag [#allocation10], 1
    %557 = vsyncpa %s556, 1
    %558 = vsyncpa [#allocation8], 1
    %s559 = scalar_lea.sflag [#allocation8], 1
    %560 = vsyncpa %s559, 1

</llo_original>
